<compile_context>
chip_gen: v6e
topology: v6e:2x2x1
jax: 0.10.0
libtpu: 0.0.40
codegen_flags: <defaults>
</compile_context>

<pallas_src>
import functools

import jax
import jax.numpy as jnp
from jax import lax
from jax.experimental import pallas as pl
from jax.experimental.pallas import tpu as pltpu

_BN_EPS = 1e-5


def _round_up(x, m):
    return ((x + m - 1) // m) * m


def _generator_kernel(*refs, n_blocks, d0, widths, b_real, b_pad,
                      matmul_dtype, use_scratch):
    """Fused forward: n_blocks x (Linear[no bias] + BN(train) + ReLU + implicit
    concat) followed by the final Linear (+ bias).

    refs layout:
      refs[0]                 : x                       (b_pad, d0)       matmul_dtype
      refs[1 .. n_blocks]     : per-block W (rows reordered to appended order)
      refs[1 + n_blocks]      : packed [gamma; beta]    (2, sum(o_k))     f32
      refs[2 + n_blocks]      : final W (reordered, lane-padded)          matmul_dtype
      refs[3 + n_blocks]      : final b (lane-padded)   (1, out_pad)      f32
      refs[4 + n_blocks]      : output                  (b_pad, out_pad)  f32
      refs[5 + n_blocks]      : concat scratch (b_pad, dim_total)  [only if use_scratch]
    """
    x_ref = refs[0]
    w_refs = refs[1:1 + n_blocks]
    gb_ref = refs[1 + n_blocks]
    wf_ref = refs[2 + n_blocks]
    bf_ref = refs[3 + n_blocks]
    out_ref = refs[4 + n_blocks]
    h_ref = refs[5 + n_blocks] if use_scratch else None

    inv_b = 1.0 / float(b_real)
    need_mask = b_pad != b_real
    if need_mask:
        row_mask = (lax.broadcasted_iota(jnp.int32, (b_pad, 1), 0)
                    < b_real).astype(jnp.float32)

    gb = gb_ref[...]                                      # (2, sum(o_k)) f32

    if use_scratch:
        # Persistent concat buffer: segments appended at 128-aligned offsets.
        h_ref[:, 0:d0] = x_ref[...]
        segs = None
        seg_sizes = None
    else:
        segs = [x_ref[...]]
        seg_sizes = [d0]

    dim_cur = d0
    gb_off = 0
    for k in range(n_blocks):
        o = widths[k]

        if use_scratch:
            # Single lane-dense dot with full K (accumulates inside the MXU).
            lin = jnp.dot(h_ref[:, 0:dim_cur], w_refs[k][...],
                          preferred_element_type=jnp.float32)
        else:
            # Split-weight matmul == (implicit concat) @ W.
            w = w_refs[k][...]
            lin = None
            off = 0
            for seg, sz in zip(segs, seg_sizes):
                part = jnp.dot(seg, w[off:off + sz, :],
                               preferred_element_type=jnp.float32)
                lin = part if lin is None else lin + part
                off += sz

        # BatchNorm1d (training mode): one-pass sum / sum-of-squares stats,
        # affine folded into one scale/shift pass + ReLU.  All in f32.
        mean = jnp.sum(lin, axis=0, keepdims=True) * inv_b          # (1, o)
        msq = jnp.sum(lin * lin, axis=0, keepdims=True) * inv_b     # (1, o)
        var = jnp.maximum(msq - mean * mean, 0.0)
        gamma = gb[0:1, gb_off:gb_off + o]
        beta = gb[1:2, gb_off:gb_off + o]
        scale = gamma * lax.rsqrt(var + _BN_EPS)                    # EUP
        shift = beta - mean * scale
        y = jnp.maximum(lin * scale + shift, 0.0)                   # (b_pad, o)
        if need_mask:
            y = y * row_mask          # keep zero-padded batch rows exactly 0
        y = y.astype(matmul_dtype)

        if use_scratch:
            h_ref[:, dim_cur:dim_cur + o] = y
        else:
            segs.append(y)
            seg_sizes.append(o)
        dim_cur += o
        gb_off += o

    # Final Linear into a lane-dense (128-multiple wide) output slab.
    if use_scratch:
        acc = jnp.dot(h_ref[:, 0:dim_cur], wf_ref[...],
                      preferred_element_type=jnp.float32)
    else:
        wf = wf_ref[...]
        acc = None
        off = 0
        for seg, sz in zip(segs, seg_sizes):
            part = jnp.dot(seg, wf[off:off + sz, :],
                           preferred_element_type=jnp.float32)
            acc = part if acc is None else acc + part
            off += sz
    out_ref[...] = acc + bf_ref[...]


def generator_forward(params, x, *, matmul_dtype=jnp.bfloat16):
    """Pallas-backed CTGAN Generator forward (single fused kernel)."""
    B, d0 = x.shape
    residuals = params["residuals"]
    n_blocks = len(residuals)
    widths = tuple(int(w.shape[1]) for (w, _, _, _) in residuals)
    wf = params["final_w"]
    bf = params["final_b"]
    dim_total = d0 + sum(widths)
    data_dim = int(wf.shape[1])
    out_pad = _round_up(data_dim, 128)          # lane-dense output slab

    # Pad batch to a sublane multiple; padded rows are zero and stay zero.
    b_pad = _round_up(B, 8)
    x_p = x if b_pad == B else jnp.pad(x, ((0, b_pad - B), (0, 0)))
    x_p = x_p.astype(matmul_dtype)

    # Reorder weight rows from the PyTorch concat order [y_{k-1},...,y_1,x] to
    # the appended order [x, y_1, ..., y_{k-1}] so segment offsets are static.
    def reorder_rows(w, k):
        sizes = [widths[j] for j in range(k - 1, -1, -1)] + [d0]
        blocks, off = [], 0
        for s in sizes:
            blocks.append(w[off:off + s])
            off += s
        return jnp.concatenate(blocks[::-1], axis=0)

    ws = [reorder_rows(w, k).astype(matmul_dtype)
          for k, (w, _, _, _) in enumerate(residuals)]
    wf_r = reorder_rows(wf, n_blocks)
    wf_p = jnp.pad(wf_r, ((0, 0), (0, out_pad - data_dim))).astype(matmul_dtype)
    bf_p = jnp.pad(bf, (0, out_pad - data_dim)).reshape(1, out_pad)
    bf_p = bf_p.astype(jnp.float32)

    # Pack all per-block gamma/beta into one (2, sum(o_k)) slab (single DMA).
    gamma_all = jnp.concatenate([g for (_, _, g, _) in residuals]).reshape(1, -1)
    beta_all = jnp.concatenate([bt for (_, _, _, bt) in residuals]).reshape(1, -1)
    gb = jnp.concatenate([gamma_all, beta_all], axis=0).astype(jnp.float32)

    # Use the single-dot concat-scratch path only when every segment width is
    # lane-aligned (the realistic CTGAN case, e.g. 256-wide blocks).
    use_scratch = (d0 % 128 == 0) and all(o % 128 == 0 for o in widths)
    scratch_shapes = (
        [pltpu.VMEM((b_pad, dim_total), matmul_dtype)] if use_scratch else [])

    kernel = functools.partial(
        _generator_kernel, n_blocks=n_blocks, d0=d0, widths=widths,
        b_real=B, b_pad=b_pad, matmul_dtype=matmul_dtype,
        use_scratch=use_scratch)

    # Explicit VMEM limit from the computed footprint (no grid -> no
    # double-buffering, everything is resident exactly once).
    def _tile_bytes(shape, dtype):
        itemsize = jnp.dtype(dtype).itemsize
        sub = 8 * (4 // itemsize)
        return _round_up(shape[0], sub) * _round_up(shape[1], 128) * itemsize

    footprint = _tile_bytes(x_p.shape, matmul_dtype)
    for w in ws:
        footprint += _tile_bytes(w.shape, matmul_dtype)
    footprint += _tile_bytes(gb.shape, jnp.float32)
    footprint += _tile_bytes(wf_p.shape, matmul_dtype)
    footprint += _tile_bytes(bf_p.shape, jnp.float32)
    footprint += _tile_bytes((b_pad, out_pad), jnp.float32)
    if use_scratch:
        footprint += _tile_bytes((b_pad, dim_total), matmul_dtype)
    footprint += 4 * _tile_bytes((b_pad, dim_total), jnp.float32)  # live temps
    vmem_limit = int(min(2 * footprint + (8 << 20), 112 << 20))

    vmem_spec = pl.BlockSpec(memory_space=pltpu.MemorySpace.VMEM)
    n_inputs = 1 + n_blocks + 3

    out_padded = pl.pallas_call(
        kernel,
        out_shape=jax.ShapeDtypeStruct((b_pad, out_pad), jnp.float32),
        in_specs=[vmem_spec] * n_inputs,
        out_specs=vmem_spec,
        scratch_shapes=scratch_shapes,
        compiler_params=pltpu.CompilerParams(vmem_limit_bytes=vmem_limit),
    )(x_p, *ws, gb, wf_p, bf_p)
    return out_padded[:B, :data_dim]


def init_generator_params(key, embedding_dim, generator_dim, data_dim):
    """Param init mirroring PyTorch defaults (Linear: U(-1/sqrt(in), 1/sqrt(in));
    BatchNorm1d: gamma=1, beta=0).  Weights stored as (in, out) == W.T."""
    params = {"residuals": []}
    dim = embedding_dim
    for item in generator_dim:
        key, kw, kb = jax.random.split(key, 3)
        bound = 1.0 / (dim ** 0.5)
        w = jax.random.uniform(kw, (dim, item), jnp.float32, -bound, bound)
        b = jax.random.uniform(kb, (item,), jnp.float32, -bound, bound)
        gamma = jnp.ones((item,), jnp.float32)
        beta = jnp.zeros((item,), jnp.float32)
        params["residuals"].append((w, b, gamma, beta))
        dim += item
    key, kw, kb = jax.random.split(key, 3)
    bound = 1.0 / (dim ** 0.5)
    params["final_w"] = jax.random.uniform(
        kw, (dim, data_dim), jnp.float32, -bound, bound)
    params["final_b"] = jax.random.uniform(
        kb, (data_dim,), jnp.float32, -bound, bound)
    return params


def generator_forward_ref(params, x):
    """Pure-JAX reference (same math as the PyTorch module in training mode,
    including the residual Linear biases that the kernel provably elides)."""
    h = x
    for (w, b, gamma, beta) in params["residuals"]:
        lin = h @ w + b
        mean = jnp.mean(lin, axis=0, keepdims=True)
        var = jnp.mean((lin - mean) ** 2, axis=0, keepdims=True)
        y = (lin - mean) * jax.lax.rsqrt(var + _BN_EPS) * gamma + beta
        y = jnp.maximum(y, 0.0)
        h = jnp.concatenate([y, h], axis=1)
    return h @ params["final_w"] + params["final_b"]


if __name__ == "__main__":
    def run_case(seed, embedding_dim, generator_dim, data_dim, batch,
                 matmul_dtype, atol, rtol):
        key = jax.random.fold_in(jax.random.PRNGKey(0), seed)
        kx, kp = jax.random.split(key)
        x = jax.random.normal(kx, (batch, embedding_dim), jnp.float32)
        params = init_generator_params(kp, embedding_dim, generator_dim,
                                       data_dim)
        out = jax.block_until_ready(
            generator_forward(params, x, matmul_dtype=matmul_dtype))
        ref = generator_forward_ref(params, x)
        assert out.shape == (batch, data_dim)
        assert jnp.allclose(out, ref, atol=atol, rtol=rtol), (
            "max abs err = %f" % float(jnp.max(jnp.abs(out - ref))))

    # 1) Toy shapes, f32 MXU path (tight check of the fused math, split-K).
    run_case(0, 32, (32, 32), 16, 8, jnp.float32, 1e-4, 1e-4)
    # 2) Toy shapes, bf16 MXU path (split-K).
    run_case(1, 32, (32, 32), 16, 8, jnp.bfloat16, 5e-2, 5e-2)
    # 3) Batch not a multiple of 8 -> zero-pad + row-mask path, f32.
    run_case(2, 32, (32, 32), 16, 5, jnp.float32, 1e-4, 1e-4)
    # 4) 128-aligned dims -> single-dot concat-scratch path, bf16.
    run_case(3, 128, (128, 128), 128, 16, jnp.bfloat16, 5e-2, 5e-2)

    print("KERNEL_OK")
</pallas_src>

<mosaic_0001>
module attributes {stable_mosaic.version = 11 : i64} {
  func.func @_generator_kernel(%arg0: memref<8x32xf32, #tpu.memory_space<vmem>>, %arg1: memref<32x32xf32, #tpu.memory_space<vmem>>, %arg2: memref<64x32xf32, #tpu.memory_space<vmem>>, %arg3: memref<2x64xf32, #tpu.memory_space<vmem>>, %arg4: memref<96x128xf32, #tpu.memory_space<vmem>>, %arg5: memref<1x128xf32, #tpu.memory_space<vmem>>, %arg6: memref<8x128xf32, #tpu.memory_space<vmem>>) attributes {dimension_semantics = [], scalar_prefetch = 0 : i64, scratch_operands = 0 : i64, tpu.core_type = #tpu.core_type<tc>} {
    %c0 = arith.constant 0 : index
    %c0_0 = arith.constant 0 : index
    %0 = vector.load %arg3[%c0, %c0_0] : memref<2x64xf32, #tpu.memory_space<vmem>>, vector<2x64xf32>
    %c0_1 = arith.constant 0 : index
    %c0_2 = arith.constant 0 : index
    %1 = vector.load %arg0[%c0_1, %c0_2] : memref<8x32xf32, #tpu.memory_space<vmem>>, vector<8x32xf32>
    %c0_3 = arith.constant 0 : index
    %c0_4 = arith.constant 0 : index
    %2 = vector.load %arg1[%c0_3, %c0_4] : memref<32x32xf32, #tpu.memory_space<vmem>>, vector<32x32xf32>
    %cst = arith.constant dense<0.000000e+00> : vector<8x32xf32>
    %3 = tpu.matmul %1, %2, %cst {dimension_numbers = #tpu.dot_dimension_numbers<[1], [0], [0], [1], [0, 0, 1, 1], [], []>} : vector<8x32xf32>, vector<32x32xf32>, vector<8x32xf32> -> vector<8x32xf32>
    %cst_5 = arith.constant dense<0.000000e+00> : vector<32xf32>
    %4 = vector.multi_reduction <add>, %3, %cst_5 [0] : vector<8x32xf32> to vector<32xf32>
    %5 = vector.shape_cast %4 : vector<32xf32> to vector<1x32xf32>
    %cst_6 = arith.constant 1.250000e-01 : f32
    %6 = vector.broadcast %cst_6 : f32 to vector<1x32xf32>
    %7 = arith.mulf %5, %6 : vector<1x32xf32>
    %8 = arith.mulf %3, %3 : vector<8x32xf32>
    %cst_7 = arith.constant dense<0.000000e+00> : vector<32xf32>
    %9 = vector.multi_reduction <add>, %8, %cst_7 [0] : vector<8x32xf32> to vector<32xf32>
    %10 = vector.shape_cast %9 : vector<32xf32> to vector<1x32xf32>
    %cst_8 = arith.constant 1.250000e-01 : f32
    %11 = vector.broadcast %cst_8 : f32 to vector<1x32xf32>
    %12 = arith.mulf %10, %11 : vector<1x32xf32>
    %13 = arith.mulf %7, %7 : vector<1x32xf32>
    %14 = arith.subf %12, %13 : vector<1x32xf32>
    %cst_9 = arith.constant 0.000000e+00 : f32
    %15 = vector.broadcast %cst_9 : f32 to vector<1x32xf32>
    %16 = arith.maximumf %14, %15 : vector<1x32xf32>
    %17 = vector.extract_strided_slice %0 {offsets = [0, 0], sizes = [1, 32], strides = [1, 1]} : vector<2x64xf32> to vector<1x32xf32>
    %18 = vector.extract_strided_slice %0 {offsets = [1, 0], sizes = [1, 32], strides = [1, 1]} : vector<2x64xf32> to vector<1x32xf32>
    %cst_10 = arith.constant 9.99999974E-6 : f32
    %19 = vector.broadcast %cst_10 : f32 to vector<1x32xf32>
    %20 = arith.addf %16, %19 : vector<1x32xf32>
    %21 = math.rsqrt %20 : vector<1x32xf32>
    %22 = arith.mulf %17, %21 : vector<1x32xf32>
    %23 = arith.mulf %7, %22 : vector<1x32xf32>
    %24 = arith.subf %18, %23 : vector<1x32xf32>
    %25 = vector.broadcast %22 : vector<1x32xf32> to vector<8x32xf32>
    %26 = arith.mulf %3, %25 : vector<8x32xf32>
    %27 = vector.broadcast %24 : vector<1x32xf32> to vector<8x32xf32>
    %28 = arith.addf %26, %27 : vector<8x32xf32>
    %cst_11 = arith.constant 0.000000e+00 : f32
    %29 = vector.broadcast %cst_11 : f32 to vector<8x32xf32>
    %30 = arith.maximumf %28, %29 : vector<8x32xf32>
    %c0_12 = arith.constant 0 : index
    %c0_13 = arith.constant 0 : index
    %31 = vector.load %arg2[%c0_12, %c0_13] : memref<64x32xf32, #tpu.memory_space<vmem>>, vector<64x32xf32>
    %32 = vector.extract_strided_slice %31 {offsets = [0, 0], sizes = [32, 32], strides = [1, 1]} : vector<64x32xf32> to vector<32x32xf32>
    %cst_14 = arith.constant dense<0.000000e+00> : vector<8x32xf32>
    %33 = tpu.matmul %1, %32, %cst_14 {dimension_numbers = #tpu.dot_dimension_numbers<[1], [0], [0], [1], [0, 0, 1, 1], [], []>} : vector<8x32xf32>, vector<32x32xf32>, vector<8x32xf32> -> vector<8x32xf32>
    %34 = vector.extract_strided_slice %31 {offsets = [32, 0], sizes = [32, 32], strides = [1, 1]} : vector<64x32xf32> to vector<32x32xf32>
    %cst_15 = arith.constant dense<0.000000e+00> : vector<8x32xf32>
    %35 = tpu.matmul %30, %34, %cst_15 {dimension_numbers = #tpu.dot_dimension_numbers<[1], [0], [0], [1], [0, 0, 1, 1], [], []>} : vector<8x32xf32>, vector<32x32xf32>, vector<8x32xf32> -> vector<8x32xf32>
    %36 = arith.addf %33, %35 : vector<8x32xf32>
    %cst_16 = arith.constant dense<0.000000e+00> : vector<32xf32>
    %37 = vector.multi_reduction <add>, %36, %cst_16 [0] : vector<8x32xf32> to vector<32xf32>
    %38 = vector.shape_cast %37 : vector<32xf32> to vector<1x32xf32>
    %cst_17 = arith.constant 1.250000e-01 : f32
    %39 = vector.broadcast %cst_17 : f32 to vector<1x32xf32>
    %40 = arith.mulf %38, %39 : vector<1x32xf32>
    %41 = arith.mulf %36, %36 : vector<8x32xf32>
    %cst_18 = arith.constant dense<0.000000e+00> : vector<32xf32>
    %42 = vector.multi_reduction <add>, %41, %cst_18 [0] : vector<8x32xf32> to vector<32xf32>
    %43 = vector.shape_cast %42 : vector<32xf32> to vector<1x32xf32>
    %cst_19 = arith.constant 1.250000e-01 : f32
    %44 = vector.broadcast %cst_19 : f32 to vector<1x32xf32>
    %45 = arith.mulf %43, %44 : vector<1x32xf32>
    %46 = arith.mulf %40, %40 : vector<1x32xf32>
    %47 = arith.subf %45, %46 : vector<1x32xf32>
    %cst_20 = arith.constant 0.000000e+00 : f32
    %48 = vector.broadcast %cst_20 : f32 to vector<1x32xf32>
    %49 = arith.maximumf %47, %48 : vector<1x32xf32>
    %50 = vector.extract_strided_slice %0 {offsets = [0, 32], sizes = [1, 32], strides = [1, 1]} : vector<2x64xf32> to vector<1x32xf32>
    %51 = vector.extract_strided_slice %0 {offsets = [1, 32], sizes = [1, 32], strides = [1, 1]} : vector<2x64xf32> to vector<1x32xf32>
    %cst_21 = arith.constant 9.99999974E-6 : f32
    %52 = vector.broadcast %cst_21 : f32 to vector<1x32xf32>
    %53 = arith.addf %49, %52 : vector<1x32xf32>
    %54 = math.rsqrt %53 : vector<1x32xf32>
    %55 = arith.mulf %50, %54 : vector<1x32xf32>
    %56 = arith.mulf %40, %55 : vector<1x32xf32>
    %57 = arith.subf %51, %56 : vector<1x32xf32>
    %58 = vector.broadcast %55 : vector<1x32xf32> to vector<8x32xf32>
    %59 = arith.mulf %36, %58 : vector<8x32xf32>
    %60 = vector.broadcast %57 : vector<1x32xf32> to vector<8x32xf32>
    %61 = arith.addf %59, %60 : vector<8x32xf32>
    %cst_22 = arith.constant 0.000000e+00 : f32
    %62 = vector.broadcast %cst_22 : f32 to vector<8x32xf32>
    %63 = arith.maximumf %61, %62 : vector<8x32xf32>
    %c0_23 = arith.constant 0 : index
    %c0_24 = arith.constant 0 : index
    %64 = vector.load %arg4[%c0_23, %c0_24] : memref<96x128xf32, #tpu.memory_space<vmem>>, vector<96x128xf32>
    %65 = vector.extract_strided_slice %64 {offsets = [0, 0], sizes = [32, 128], strides = [1, 1]} : vector<96x128xf32> to vector<32x128xf32>
    %cst_25 = arith.constant dense<0.000000e+00> : vector<8x128xf32>
    %66 = tpu.matmul %1, %65, %cst_25 {dimension_numbers = #tpu.dot_dimension_numbers<[1], [0], [0], [1], [0, 0, 1, 1], [], []>} : vector<8x32xf32>, vector<32x128xf32>, vector<8x128xf32> -> vector<8x128xf32>
    %67 = vector.extract_strided_slice %64 {offsets = [32, 0], sizes = [32, 128], strides = [1, 1]} : vector<96x128xf32> to vector<32x128xf32>
    %cst_26 = arith.constant dense<0.000000e+00> : vector<8x128xf32>
    %68 = tpu.matmul %30, %67, %cst_26 {dimension_numbers = #tpu.dot_dimension_numbers<[1], [0], [0], [1], [0, 0, 1, 1], [], []>} : vector<8x32xf32>, vector<32x128xf32>, vector<8x128xf32> -> vector<8x128xf32>
    %69 = arith.addf %66, %68 : vector<8x128xf32>
    %70 = vector.extract_strided_slice %64 {offsets = [64, 0], sizes = [32, 128], strides = [1, 1]} : vector<96x128xf32> to vector<32x128xf32>
    %cst_27 = arith.constant dense<0.000000e+00> : vector<8x128xf32>
    %71 = tpu.matmul %63, %70, %cst_27 {dimension_numbers = #tpu.dot_dimension_numbers<[1], [0], [0], [1], [0, 0, 1, 1], [], []>} : vector<8x32xf32>, vector<32x128xf32>, vector<8x128xf32> -> vector<8x128xf32>
    %72 = arith.addf %69, %71 : vector<8x128xf32>
    %c0_28 = arith.constant 0 : index
    %c0_29 = arith.constant 0 : index
    %73 = vector.load %arg5[%c0_28, %c0_29] : memref<1x128xf32, #tpu.memory_space<vmem>>, vector<1x128xf32>
    %74 = vector.broadcast %73 : vector<1x128xf32> to vector<8x128xf32>
    %75 = arith.addf %72, %74 : vector<8x128xf32>
    %c0_30 = arith.constant 0 : index
    %c0_31 = arith.constant 0 : index
    %76 = vector.load %arg6[%c0_30, %c0_31] : memref<8x128xf32, #tpu.memory_space<vmem>>, vector<8x128xf32>
    tpu.vector_store %arg6[%c0_30, %c0_31], %75 {strides = array<i32>} : memref<8x128xf32, #tpu.memory_space<vmem>>, vector<8x128xf32>,
    return
  }
}

</mosaic_0001>

<llo_original>
// kernel: tpu_custom_call.1
$region0: #{tpu_custom_call.1}
  #allocation0 [shape = 'u32[]', space=smem, size = 0x4, offset = 0x4, fixed_abs, tag = 'smem constant byte address 0x4 - core index']
  #allocation1 [shape = 'u32[144,128]{1,0:T(1,128)}', space=vmem, size = 0x12000, scoped, tag = 'internal scratch']
  %s0 = inlined_call_operand.hbm [shape: f32[8,32], index: 0, kind: input, shape index: {}]
  %s1 = inlined_call_operand.hbm [shape: f32[32,32], index: 1, kind: input, shape index: {}]
  %s2 = inlined_call_operand.vmem [shape: f32[64,32], index: 2, kind: input, shape index: {}]
  %s3 = inlined_call_operand.vmem [shape: f32[2,64], index: 3, kind: input, shape index: {}]
  %s4 = inlined_call_operand.vmem [shape: f32[96,128], index: 4, kind: input, shape index: {}]
  %s5 = inlined_call_operand.vmem [shape: f32[1,128], index: 5, kind: input, shape index: {}]
  %s6 = inlined_call_operand.hbm [shape: f32[8,128], index: 6, kind: output, shape index: {}]
  %s7 = sld [smem:[#allocation0]]
  $region42: #{tpu_custom_call.1} parent=0
    _
  %s9 = ssub.s32 1, %s7
  %s10 = scalar_select 0, %s9, %s7
  $region1: #{tpu_custom_call.1} parent=0
    #allocation2 [shape = 'u8[4096]{0}', space=vmem, size = 0x1000, scoped, tag = 'input window, operand 0, single buffered']
    #allocation3 [shape = 's32[1]{0}', space=sflag, size = 0x4, scoped, tag = 'scoped memory for tpu_custom_call.1']
    #allocation4 [shape = 's32[1]{0}', space=sflag, size = 0x4, scoped, tag = 'scoped memory for tpu_custom_call.1']
    #allocation5 [shape = 'u8[16384]{0}', space=vmem, size = 0x4000, scoped, tag = 'input window, operand 1, single buffered']
    #allocation6 [shape = 's32[1]{0}', space=sflag, size = 0x4, scoped, tag = 'scoped memory for tpu_custom_call.1']
    #allocation7 [shape = 'u8[4096]{0}', space=vmem, size = 0x1000, scoped, tag = 'output window, operand 0, single buffered']
    %11 = vsyncpa [#allocation3], 0
    %12 = vsyncpa [#allocation6], 0
    %13 = vsyncpa [#allocation4], 0
    // Predicated region
    $region2: #{tpu_custom_call.1} parent=1 // pred_check
      _
    $region3: #{tpu_custom_call.1} parent=1 // pred_check_branch
      %15 = sbr.rel (0) target = $region5
    $region4: #{tpu_custom_call.1} parent=1 // pred_region
      %s17 = ssub.s32 128, 128
      %18 = vsyncadd [#allocation3], %s17
      %s20 = sshll.u32 [#allocation2], 4
      %s21 = int_to_ptr.vmem [resolvable:$true] %s20
      %23 = dma.hbm_to_vmem [thread:$0]  %s0, 128, %s21, [#allocation3]
    $region5: #{tpu_custom_call.1} parent=1 // pred_fallthru
      _
    // Predicated region
    $region6: #{tpu_custom_call.1} parent=1 // pred_check
      _
    $region7: #{tpu_custom_call.1} parent=1 // pred_check_branch
      %25 = sbr.rel (0) target = $region9
    $region8: #{tpu_custom_call.1} parent=1 // pred_region
      %s27 = ssub.s32 512, 512
      %28 = vsyncadd [#allocation6], %s27
      %s29 = sshll.u32 [#allocation5], 4
      %s30 = int_to_ptr.vmem [resolvable:$true] %s29
      %35 = dma.hbm_to_vmem [thread:$0]  %s1, 512, %s30, [#allocation6], 128, 128, 8
    $region9: #{tpu_custom_call.1} parent=1 // pred_fallthru
      _
    // Predicated region
    $region10: #{tpu_custom_call.1} parent=1 // pred_check
      _
    $region11: #{tpu_custom_call.1} parent=1 // pred_check_branch
      %37 = sbr.rel (0) target = $region13
    $region12: #{tpu_custom_call.1} parent=1 // pred_region
      _
    $region13: #{tpu_custom_call.1} parent=1 // pred_fallthru
      _
    // Predicated region
    $region14: #{tpu_custom_call.1} parent=1 // pred_check
      _
    $region15: #{tpu_custom_call.1} parent=1 // pred_check_branch
      %39 = sbr.rel (0) target = $region17
    $region16: #{tpu_custom_call.1} parent=1 // pred_region
      _
    $region17: #{tpu_custom_call.1} parent=1 // pred_fallthru
      _
    // Predicated region
    $region18: #{tpu_custom_call.1} parent=1 // pred_check
      _
    $region19: #{tpu_custom_call.1} parent=1 // pred_check_branch
      %41 = sbr.rel (0) target = $region21
    $region20: #{tpu_custom_call.1} parent=1 // pred_region
      _
    $region21: #{tpu_custom_call.1} parent=1 // pred_fallthru
      _
    // Predicated region
    $region22: #{tpu_custom_call.1} parent=1 // pred_check
      _
    $region23: #{tpu_custom_call.1} parent=1 // pred_check_branch
      %43 = sbr.rel (0) target = $region25
    $region24: #{tpu_custom_call.1} parent=1 // pred_region
      _
    $region25: #{tpu_custom_call.1} parent=1 // pred_fallthru
      _
    // Predicated region
    $region26: #{tpu_custom_call.1} parent=1 // pred_check
      _
    $region27: #{tpu_custom_call.1} parent=1 // pred_check_branch
      %45 = sbr.rel (0) target = $region29
    $region28: #{tpu_custom_call.1} parent=1 // pred_region
      %46 = dma.done [#allocation3], 128
    $region29: #{tpu_custom_call.1} parent=1 // pred_fallthru
      _
    // Predicated region
    $region30: #{tpu_custom_call.1} parent=1 // pred_check
      _
    $region31: #{tpu_custom_call.1} parent=1 // pred_check_branch
      %48 = sbr.rel (0) target = $region33
    $region32: #{tpu_custom_call.1} parent=1 // pred_region
      %49 = dma.done [#allocation6], 512
    $region33: #{tpu_custom_call.1} parent=1 // pred_fallthru
      _
    %v50 = vld [vmem:[%s3] sm:$0x3]
    %v51 = vld [vmem:[#allocation2] sm:$0xff]
    %v52 = vld [vmem:[#allocation5] sm:$0xff]
    %v53 = vld [vmem:[#allocation5 + $0x8] sm:$0xff]
    %v54 = vld [vmem:[#allocation5 + $0x10] sm:$0xff]
    %v55 = vld [vmem:[#allocation5 + $0x18] sm:$0xff]
    %vm56 = vcmask 261120
    %v58 = vsel %vm56, %v51, 0
    %60 = vmatprep.subr.mxu0 0.0
    %61 = vmatpush1.msra.mxu0 0.0
    %62 = vmatprep.subr.mxu0 0.0
    %63 = vmatpush1.msra.mxu0 0.0
    %64 = vmatprep.subr.mxu0 0.0
    %65 = vmatpush1.msra.mxu0 0.0
    %66 = vmatprep.subr.mxu0 0.0
    %67 = vmatpush1.msra.mxu0 0.0
    %68 = vmatprep.subr.mxu0 0.0
    %69 = vmatpush1.msra.mxu0 0.0
    %70 = vmatprep.subr.mxu0 0.0
    %71 = vmatpush1.msra.mxu0 0.0
    %72 = vmatprep.subr.mxu0 0.0
    %73 = vmatpush1.msra.mxu0 0.0
    %74 = vmatprep.subr.mxu0 0.0
    %75 = vmatpush1.msra.mxu0 0.0
    %76 = vmatprep.subr.mxu0 0.0
    %77 = vmatpush1.msra.mxu0 0.0
    %78 = vmatprep.subr.mxu0 0.0
    %79 = vmatpush1.msra.mxu0 0.0
    %80 = vmatprep.subr.mxu0 0.0
    %81 = vmatpush1.msra.mxu0 0.0
    %82 = vmatprep.subr.mxu0 0.0
    %83 = vmatpush1.msra.mxu0 0.0
    %84 = vmatprep.subr.mxu0 0.0
    %85 = vmatpush1.msra.mxu0 %v55
    %86 = vmatprep.subr.mxu0 0.0
    %87 = vmatpush1.msra.mxu0 %v54
    %88 = vmatprep.subr.mxu0 0.0
    %89 = vmatpush1.msra.mxu0 %v53
    %90 = vmatprep.subr.mxu0 0.0
    %91 = vmatpush1.msra.mxu0 %v52
    %92 = vmatprep.subr.mxu0 0.0
    %93 = vmatpush2.msra.mxu0 0.0
    %94 = vmatprep.subr.mxu0 0.0
    %95 = vmatpush2.msra.mxu0 0.0
    %96 = vmatprep.subr.mxu0 0.0
    %97 = vmatpush2.msra.mxu0 0.0
    %98 = vmatprep.subr.mxu0 0.0
    %99 = vmatpush2.msra.mxu0 0.0
    %100 = vmatprep.subr.mxu0 0.0
    %101 = vmatpush2.msra.mxu0 0.0
    %102 = vmatprep.subr.mxu0 0.0
    %103 = vmatpush2.msra.mxu0 0.0
    %104 = vmatprep.subr.mxu0 0.0
    %105 = vmatpush2.msra.mxu0 0.0
    %106 = vmatprep.subr.mxu0 0.0
    %107 = vmatpush2.msra.mxu0 0.0
    %108 = vmatprep.subr.mxu0 0.0
    %109 = vmatpush2.msra.mxu0 0.0
    %110 = vmatprep.subr.mxu0 0.0
    %111 = vmatpush2.msra.mxu0 0.0
    %112 = vmatprep.subr.mxu0 0.0
    %113 = vmatpush2.msra.mxu0 0.0
    %114 = vmatprep.subr.mxu0 0.0
    %115 = vmatpush2.msra.mxu0 0.0
    %116 = vmatprep.subr.mxu0 0.0
    %117 = vmatpush2.msra.mxu0 0.0
    %118 = vmatprep.subr.mxu0 0.0
    %119 = vmatpush2.msra.mxu0 0.0
    %120 = vmatprep.subr.mxu0 0.0
    %121 = vmatpush2.msra.mxu0 0.0
    %122 = vmatprep.subr.mxu0 0.0
    %123 = vmatpush2.msra.mxu0 0.0
    %124 = vmatprep.mubr.f32.mxu0 0.0
    %125 = vmatmul.mubr.f32.gmra.mxu0 %v58
    %v126 = vpop.f32.mrf.mxu0
    %v127 = vadd.f32 0.0, %v126
    %v128 = vpop.f32.mrf.mxu0
    %129 = vdwg.mxu0
    %v130 = vsel %vm56, %v127, 0.0
    %v131 = vrot.slane %v130, 4
    %v132 = vadd.f32 %v130, %v131
    %v133 = vrot.slane %v132, 2
    %v134 = vadd.f32 %v132, %v133
    %v135 = vrot.slane %v134, 1
    %v136 = vadd.f32 %v134, %v135
    %v137 = vmul.f32 %v136, 0.125
    %v138 = vmul.f32 %v127, %v127
    %v139 = vsel %vm56, %v138, 0.0
    %v140 = vrot.slane %v139, 4
    %v141 = vadd.f32 %v139, %v140
    %v142 = vrot.slane %v141, 2
    %v143 = vadd.f32 %v141, %v142
    %v144 = vrot.slane %v143, 1
    %v145 = vadd.f32 %v143, %v144
    %v146 = vmul.f32 %v145, 0.125
    %v147 = vmul.f32 %v137, %v137
    %v148 = vsub.f32 %v146, %v147
    %v149 = vmax.f32 %v148, 0.0
    %v150 = vadd.f32 %v149, 1e-05
    %v151 = vrsqrt.pop %v150
    %v152 = vmul.f32 %v50, %v151
    %v153 = vmul.f32 %v137, %v152
    %v155 = vrot.slane %v153, 7
    %v157 = vsub.f32 %v50, %v155
    %v158 = vlaneseq
    %v159 = vshrl.u32 %v158, 7
    %v160 = vsub.s32 0, %v159
    %v161 = vrot.slane %v152, %v160
    %v162 = vmul.f32 %v127, %v161
    %v163 = vlaneseq
    %v164 = vshrl.u32 %v163, 7
    %v165 = vsub.s32 1, %v164
    %v166 = vrot.slane %v157, %v165
    %v167 = vadd.f32 %v162, %v166
    %v168 = vmax.f32 %v167, 0.0
    %v169 = vld [vmem:[%s2] sm:$0xff]
    %v170 = vld [vmem:[%s2 + $0x8] sm:$0xff]
    %v171 = vld [vmem:[%s2 + $0x10] sm:$0xff]
    %v172 = vld [vmem:[%s2 + $0x18] sm:$0xff]
    %v173 = vld [vmem:[%s2 + $0x20] sm:$0xff]
    %v174 = vld [vmem:[%s2 + $0x28] sm:$0xff]
    %v175 = vld [vmem:[%s2 + $0x30] sm:$0xff]
    %v176 = vld [vmem:[%s2 + $0x38] sm:$0xff]
    %v178 = vsel %vm56, %v168, 0
    %180 = vmatprep.subr.mxu0 0.0
    %181 = vmatpush1.msra.mxu0 0.0
    %182 = vmatprep.subr.mxu0 0.0
    %183 = vmatpush1.msra.mxu0 0.0
    %184 = vmatprep.subr.mxu0 0.0
    %185 = vmatpush1.msra.mxu0 0.0
    %186 = vmatprep.subr.mxu0 0.0
    %187 = vmatpush1.msra.mxu0 0.0
    %188 = vmatprep.subr.mxu0 0.0
    %189 = vmatpush1.msra.mxu0 0.0
    %190 = vmatprep.subr.mxu0 0.0
    %191 = vmatpush1.msra.mxu0 0.0
    %192 = vmatprep.subr.mxu0 0.0
    %193 = vmatpush1.msra.mxu0 0.0
    %194 = vmatprep.subr.mxu0 0.0
    %195 = vmatpush1.msra.mxu0 0.0
    %196 = vmatprep.subr.mxu0 0.0
    %197 = vmatpush1.msra.mxu0 0.0
    %198 = vmatprep.subr.mxu0 0.0
    %199 = vmatpush1.msra.mxu0 0.0
    %200 = vmatprep.subr.mxu0 0.0
    %201 = vmatpush1.msra.mxu0 0.0
    %202 = vmatprep.subr.mxu0 0.0
    %203 = vmatpush1.msra.mxu0 0.0
    %204 = vmatprep.subr.mxu0 0.0
    %205 = vmatpush1.msra.mxu0 %v176
    %206 = vmatprep.subr.mxu0 0.0
    %207 = vmatpush1.msra.mxu0 %v175
    %208 = vmatprep.subr.mxu0 0.0
    %209 = vmatpush1.msra.mxu0 %v174
    %210 = vmatprep.subr.mxu0 0.0
    %211 = vmatpush1.msra.mxu0 %v173
    %212 = vmatprep.subr.mxu0 0.0
    %213 = vmatpush2.msra.mxu0 0.0
    %214 = vmatprep.subr.mxu0 0.0
    %215 = vmatpush2.msra.mxu0 0.0
    %216 = vmatprep.subr.mxu0 0.0
    %217 = vmatpush2.msra.mxu0 0.0
    %218 = vmatprep.subr.mxu0 0.0
    %219 = vmatpush2.msra.mxu0 0.0
    %220 = vmatprep.subr.mxu0 0.0
    %221 = vmatpush2.msra.mxu0 0.0
    %222 = vmatprep.subr.mxu0 0.0
    %223 = vmatpush2.msra.mxu0 0.0
    %224 = vmatprep.subr.mxu0 0.0
    %225 = vmatpush2.msra.mxu0 0.0
    %226 = vmatprep.subr.mxu0 0.0
    %227 = vmatpush2.msra.mxu0 0.0
    %228 = vmatprep.subr.mxu0 0.0
    %229 = vmatpush2.msra.mxu0 0.0
    %230 = vmatprep.subr.mxu0 0.0
    %231 = vmatpush2.msra.mxu0 0.0
    %232 = vmatprep.subr.mxu0 0.0
    %233 = vmatpush2.msra.mxu0 0.0
    %234 = vmatprep.subr.mxu0 0.0
    %235 = vmatpush2.msra.mxu0 0.0
    %236 = vmatprep.subr.mxu0 0.0
    %237 = vmatpush2.msra.mxu0 0.0
    %238 = vmatprep.subr.mxu0 0.0
    %239 = vmatpush2.msra.mxu0 0.0
    %240 = vmatprep.subr.mxu0 0.0
    %241 = vmatpush2.msra.mxu0 0.0
    %242 = vmatprep.subr.mxu0 0.0
    %243 = vmatpush2.msra.mxu0 0.0
    %244 = vmatprep.mubr.f32.mxu0 0.0
    %245 = vmatmul.mubr.f32.gmra.mxu0 %v178
    %v246 = vpop.f32.mrf.mxu0
    %v247 = vadd.f32 0.0, %v246
    %v248 = vpop.f32.mrf.mxu0
    %249 = vdwg.mxu0
    %250 = vmatprep.subr.mxu0 0.0
    %251 = vmatpush1.msra.mxu0 0.0
    %252 = vmatprep.subr.mxu0 0.0
    %253 = vmatpush1.msra.mxu0 0.0
    %254 = vmatprep.subr.mxu0 0.0
    %255 = vmatpush1.msra.mxu0 0.0
    %256 = vmatprep.subr.mxu0 0.0
    %257 = vmatpush1.msra.mxu0 0.0
    %258 = vmatprep.subr.mxu0 0.0
    %259 = vmatpush1.msra.mxu0 0.0
    %260 = vmatprep.subr.mxu0 0.0
    %261 = vmatpush1.msra.mxu0 0.0
    %262 = vmatprep.subr.mxu0 0.0
    %263 = vmatpush1.msra.mxu0 0.0
    %264 = vmatprep.subr.mxu0 0.0
    %265 = vmatpush1.msra.mxu0 0.0
    %266 = vmatprep.subr.mxu0 0.0
    %267 = vmatpush1.msra.mxu0 0.0
    %268 = vmatprep.subr.mxu0 0.0
    %269 = vmatpush1.msra.mxu0 0.0
    %270 = vmatprep.subr.mxu0 0.0
    %271 = vmatpush1.msra.mxu0 0.0
    %272 = vmatprep.subr.mxu0 0.0
    %273 = vmatpush1.msra.mxu0 0.0
    %274 = vmatprep.subr.mxu0 0.0
    %275 = vmatpush1.msra.mxu0 %v172
    %276 = vmatprep.subr.mxu0 0.0
    %277 = vmatpush1.msra.mxu0 %v171
    %278 = vmatprep.subr.mxu0 0.0
    %279 = vmatpush1.msra.mxu0 %v170
    %280 = vmatprep.subr.mxu0 0.0
    %281 = vmatpush1.msra.mxu0 %v169
    %282 = vmatprep.subr.mxu0 0.0
    %283 = vmatpush2.msra.mxu0 0.0
    %284 = vmatprep.subr.mxu0 0.0
    %285 = vmatpush2.msra.mxu0 0.0
    %286 = vmatprep.subr.mxu0 0.0
    %287 = vmatpush2.msra.mxu0 0.0
    %288 = vmatprep.subr.mxu0 0.0
    %289 = vmatpush2.msra.mxu0 0.0
    %290 = vmatprep.subr.mxu0 0.0
    %291 = vmatpush2.msra.mxu0 0.0
    %292 = vmatprep.subr.mxu0 0.0
    %293 = vmatpush2.msra.mxu0 0.0
    %294 = vmatprep.subr.mxu0 0.0
    %295 = vmatpush2.msra.mxu0 0.0
    %296 = vmatprep.subr.mxu0 0.0
    %297 = vmatpush2.msra.mxu0 0.0
    %298 = vmatprep.subr.mxu0 0.0
    %299 = vmatpush2.msra.mxu0 0.0
    %300 = vmatprep.subr.mxu0 0.0
    %301 = vmatpush2.msra.mxu0 0.0
    %302 = vmatprep.subr.mxu0 0.0
    %303 = vmatpush2.msra.mxu0 0.0
    %304 = vmatprep.subr.mxu0 0.0
    %305 = vmatpush2.msra.mxu0 0.0
    %306 = vmatprep.subr.mxu0 0.0
    %307 = vmatpush2.msra.mxu0 0.0
    %308 = vmatprep.subr.mxu0 0.0
    %309 = vmatpush2.msra.mxu0 0.0
    %310 = vmatprep.subr.mxu0 0.0
    %311 = vmatpush2.msra.mxu0 0.0
    %312 = vmatprep.subr.mxu0 0.0
    %313 = vmatpush2.msra.mxu0 0.0
    %314 = vmatprep.mubr.f32.mxu0 0.0
    %315 = vmatmul.mubr.f32.gmra.mxu0 %v58
    %v316 = vpop.f32.mrf.mxu0
    %v317 = vadd.f32 %v247, %v316
    %v318 = vpop.f32.mrf.mxu0
    %319 = vdwg.mxu0
    %v320 = vsel %vm56, %v317, 0.0
    %v321 = vrot.slane %v320, 4
    %v322 = vadd.f32 %v320, %v321
    %v323 = vrot.slane %v322, 2
    %v324 = vadd.f32 %v322, %v323
    %v325 = vrot.slane %v324, 1
    %v326 = vadd.f32 %v324, %v325
    %v327 = vmul.f32 %v326, 0.125
    %v328 = vmul.f32 %v317, %v317
    %v329 = vsel %vm56, %v328, 0.0
    %v330 = vrot.slane %v329, 4
    %v331 = vadd.f32 %v329, %v330
    %v332 = vrot.slane %v331, 2
    %v333 = vadd.f32 %v331, %v332
    %v334 = vrot.slane %v333, 1
    %v335 = vadd.f32 %v333, %v334
    %v336 = vmul.f32 %v335, 0.125
    %v337 = vmul.f32 %v327, %v327
    %v338 = vsub.f32 %v336, %v337
    %v339 = vmax.f32 %v338, 0.0
    %v340 = vadd.f32 %v339, 1e-05
    %v341 = vrsqrt.pop %v340
    %343 = vrot.lane.b32.xlu0 %v341, 32
    %v344 = vpop.permute.xlu0 %343
    %v346 = vmul.f32 %v50, %v344
    %348 = vrot.lane.b32.xlu0 %v346, 96
    %v349 = vpop.permute.xlu0 %348
    %v351 = vmul.f32 %v327, %v349
    %v353 = vrot.slane %v351, 7
    %354 = vrot.lane.b32.xlu0 %v353, 32
    %v355 = vpop.permute.xlu0 %354
    %v357 = vsub.f32 %v50, %v355
    %v358 = vlaneseq
    %v359 = vshrl.u32 %v358, 7
    %v360 = vsub.s32 0, %v359
    %v361 = vrot.slane %v346, %v360
    %363 = vrot.lane.b32.xlu0 %v361, 96
    %v364 = vpop.permute.xlu0 %363
    %v366 = vmul.f32 %v317, %v364
    %v367 = vlaneseq
    %v368 = vshrl.u32 %v367, 7
    %v369 = vsub.s32 1, %v368
    %v370 = vrot.slane %v357, %v369
    %372 = vrot.lane.b32.xlu0 %v370, 96
    %v373 = vpop.permute.xlu0 %372
    %v375 = vadd.f32 %v366, %v373
    %v376 = vmax.f32 %v375, 0.0
    %v377 = vld [vmem:[%s4] sm:$0xff]
    %v378 = vld [vmem:[%s4 + $0x8] sm:$0xff]
    %v379 = vld [vmem:[%s4 + $0x10] sm:$0xff]
    %v380 = vld [vmem:[%s4 + $0x18] sm:$0xff]
    %v381 = vld [vmem:[%s4 + $0x20] sm:$0xff]
    %v382 = vld [vmem:[%s4 + $0x28] sm:$0xff]
    %v383 = vld [vmem:[%s4 + $0x30] sm:$0xff]
    %v384 = vld [vmem:[%s4 + $0x38] sm:$0xff]
    %v385 = vld [vmem:[%s4 + $0x40] sm:$0xff]
    %v386 = vld [vmem:[%s4 + $0x48] sm:$0xff]
    %v387 = vld [vmem:[%s4 + $0x50] sm:$0xff]
    %v388 = vld [vmem:[%s4 + $0x58] sm:$0xff]
    %389 = vmatprep.subr.mxu0 0.0
    %390 = vmatpush1.msra.mxu0 0.0
    %391 = vmatprep.subr.mxu0 0.0
    %392 = vmatpush1.msra.mxu0 0.0
    %393 = vmatprep.subr.mxu0 0.0
    %394 = vmatpush1.msra.mxu0 0.0
    %395 = vmatprep.subr.mxu0 0.0
    %396 = vmatpush1.msra.mxu0 0.0
    %397 = vmatprep.subr.mxu0 0.0
    %398 = vmatpush1.msra.mxu0 0.0
    %399 = vmatprep.subr.mxu0 0.0
    %400 = vmatpush1.msra.mxu0 0.0
    %401 = vmatprep.subr.mxu0 0.0
    %402 = vmatpush1.msra.mxu0 0.0
    %403 = vmatprep.subr.mxu0 0.0
    %404 = vmatpush1.msra.mxu0 0.0
    %405 = vmatprep.subr.mxu0 0.0
    %406 = vmatpush1.msra.mxu0 0.0
    %407 = vmatprep.subr.mxu0 0.0
    %408 = vmatpush1.msra.mxu0 0.0
    %409 = vmatprep.subr.mxu0 0.0
    %410 = vmatpush1.msra.mxu0 0.0
    %411 = vmatprep.subr.mxu0 0.0
    %412 = vmatpush1.msra.mxu0 0.0
    %413 = vmatprep.subr.mxu0 0.0
    %414 = vmatpush1.msra.mxu0 %v384
    %415 = vmatprep.subr.mxu0 0.0
    %416 = vmatpush1.msra.mxu0 %v383
    %417 = vmatprep.subr.mxu0 0.0
    %418 = vmatpush1.msra.mxu0 %v382
    %419 = vmatprep.subr.mxu0 0.0
    %420 = vmatpush1.msra.mxu0 %v381
    %421 = vmatprep.subr.mxu0 0.0
    %422 = vmatpush2.msra.mxu0 0.0
    %423 = vmatprep.subr.mxu0 0.0
    %424 = vmatpush2.msra.mxu0 0.0
    %425 = vmatprep.subr.mxu0 0.0
    %426 = vmatpush2.msra.mxu0 0.0
    %427 = vmatprep.subr.mxu0 0.0
    %428 = vmatpush2.msra.mxu0 0.0
    %429 = vmatprep.subr.mxu0 0.0
    %430 = vmatpush2.msra.mxu0 0.0
    %431 = vmatprep.subr.mxu0 0.0
    %432 = vmatpush2.msra.mxu0 0.0
    %433 = vmatprep.subr.mxu0 0.0
    %434 = vmatpush2.msra.mxu0 0.0
    %435 = vmatprep.subr.mxu0 0.0
    %436 = vmatpush2.msra.mxu0 0.0
    %437 = vmatprep.subr.mxu0 0.0
    %438 = vmatpush2.msra.mxu0 0.0
    %439 = vmatprep.subr.mxu0 0.0
    %440 = vmatpush2.msra.mxu0 0.0
    %441 = vmatprep.subr.mxu0 0.0
    %442 = vmatpush2.msra.mxu0 0.0
    %443 = vmatprep.subr.mxu0 0.0
    %444 = vmatpush2.msra.mxu0 0.0
    %445 = vmatprep.subr.mxu0 0.0
    %446 = vmatpush2.msra.mxu0 0.0
    %447 = vmatprep.subr.mxu0 0.0
    %448 = vmatpush2.msra.mxu0 0.0
    %449 = vmatprep.subr.mxu0 0.0
    %450 = vmatpush2.msra.mxu0 0.0
    %451 = vmatprep.subr.mxu0 0.0
    %452 = vmatpush2.msra.mxu0 0.0
    %453 = vmatprep.mubr.f32.mxu0 0.0
    %454 = vmatmul.mubr.f32.gmra.mxu0 %v178
    %v455 = vpop.f32.mrf.mxu0
    %v456 = vadd.f32 0.0, %v455
    %v457 = vpop.f32.mrf.mxu0
    %458 = vdwg.mxu0
    %459 = vmatprep.subr.mxu0 0.0
    %460 = vmatpush1.msra.mxu0 0.0
    %461 = vmatprep.subr.mxu0 0.0
    %462 = vmatpush1.msra.mxu0 0.0
    %463 = vmatprep.subr.mxu0 0.0
    %464 = vmatpush1.msra.mxu0 0.0
    %465 = vmatprep.subr.mxu0 0.0
    %466 = vmatpush1.msra.mxu0 0.0
    %467 = vmatprep.subr.mxu0 0.0
    %468 = vmatpush1.msra.mxu0 0.0
    %469 = vmatprep.subr.mxu0 0.0
    %470 = vmatpush1.msra.mxu0 0.0
    %471 = vmatprep.subr.mxu0 0.0
    %472 = vmatpush1.msra.mxu0 0.0
    %473 = vmatprep.subr.mxu0 0.0
    %474 = vmatpush1.msra.mxu0 0.0
    %475 = vmatprep.subr.mxu0 0.0
    %476 = vmatpush1.msra.mxu0 0.0
    %477 = vmatprep.subr.mxu0 0.0
    %478 = vmatpush1.msra.mxu0 0.0
    %479 = vmatprep.subr.mxu0 0.0
    %480 = vmatpush1.msra.mxu0 0.0
    %481 = vmatprep.subr.mxu0 0.0
    %482 = vmatpush1.msra.mxu0 0.0
    %483 = vmatprep.subr.mxu0 0.0
    %484 = vmatpush1.msra.mxu0 %v380
    %485 = vmatprep.subr.mxu0 0.0
    %486 = vmatpush1.msra.mxu0 %v379
    %487 = vmatprep.subr.mxu0 0.0
    %488 = vmatpush1.msra.mxu0 %v378
    %489 = vmatprep.subr.mxu0 0.0
    %490 = vmatpush1.msra.mxu0 %v377
    %491 = vmatprep.subr.mxu0 0.0
    %492 = vmatpush2.msra.mxu0 0.0
    %493 = vmatprep.subr.mxu0 0.0
    %494 = vmatpush2.msra.mxu0 0.0
    %495 = vmatprep.subr.mxu0 0.0
    %496 = vmatpush2.msra.mxu0 0.0
    %497 = vmatprep.subr.mxu0 0.0
    %498 = vmatpush2.msra.mxu0 0.0
    %499 = vmatprep.subr.mxu0 0.0
    %500 = vmatpush2.msra.mxu0 0.0
    %501 = vmatprep.subr.mxu0 0.0
    %502 = vmatpush2.msra.mxu0 0.0
    %503 = vmatprep.subr.mxu0 0.0
    %504 = vmatpush2.msra.mxu0 0.0
    %505 = vmatprep.subr.mxu0 0.0
    %506 = vmatpush2.msra.mxu0 0.0
    %507 = vmatprep.subr.mxu0 0.0
    %508 = vmatpush2.msra.mxu0 0.0
    %509 = vmatprep.subr.mxu0 0.0
    %510 = vmatpush2.msra.mxu0 0.0
    %511 = vmatprep.subr.mxu0 0.0
    %512 = vmatpush2.msra.mxu0 0.0
    %513 = vmatprep.subr.mxu0 0.0
    %514 = vmatpush2.msra.mxu0 0.0
    %515 = vmatprep.subr.mxu0 0.0
    %516 = vmatpush2.msra.mxu0 0.0
    %517 = vmatprep.subr.mxu0 0.0
    %518 = vmatpush2.msra.mxu0 0.0
    %519 = vmatprep.subr.mxu0 0.0
    %520 = vmatpush2.msra.mxu0 0.0
    %521 = vmatprep.subr.mxu0 0.0
    %522 = vmatpush2.msra.mxu0 0.0
    %523 = vmatprep.mubr.f32.mxu0 0.0
    %524 = vmatmul.mubr.f32.gmra.mxu0 %v58
    %v525 = vpop.f32.mrf.mxu0
    %v526 = vadd.f32 %v456, %v525
    %v527 = vpop.f32.mrf.mxu0
    %528 = vdwg.mxu0
    %v530 = vsel %vm56, %v376, 0
    %532 = vmatprep.subr.mxu0 0.0
    %533 = vmatpush1.msra.mxu0 0.0
    %534 = vmatprep.subr.mxu0 0.0
    %535 = vmatpush1.msra.mxu0 0.0
    %536 = vmatprep.subr.mxu0 0.0
    %537 = vmatpush1.msra.mxu0 0.0
    %538 = vmatprep.subr.mxu0 0.0
    %539 = vmatpush1.msra.mxu0 0.0
    %540 = vmatprep.subr.mxu0 0.0
    %541 = vmatpush1.msra.mxu0 0.0
    %542 = vmatprep.subr.mxu0 0.0
    %543 = vmatpush1.msra.mxu0 0.0
    %544 = vmatprep.subr.mxu0 0.0
    %545 = vmatpush1.msra.mxu0 0.0
    %546 = vmatprep.subr.mxu0 0.0
    %547 = vmatpush1.msra.mxu0 0.0
    %548 = vmatprep.subr.mxu0 0.0
    %549 = vmatpush1.msra.mxu0 0.0
    %550 = vmatprep.subr.mxu0 0.0
    %551 = vmatpush1.msra.mxu0 0.0
    %552 = vmatprep.subr.mxu0 0.0
    %553 = vmatpush1.msra.mxu0 0.0
    %554 = vmatprep.subr.mxu0 0.0
    %555 = vmatpush1.msra.mxu0 0.0
    %556 = vmatprep.subr.mxu0 0.0
    %557 = vmatpush1.msra.mxu0 %v388
    %558 = vmatprep.subr.mxu0 0.0
    %559 = vmatpush1.msra.mxu0 %v387
    %560 = vmatprep.subr.mxu0 0.0
    %561 = vmatpush1.msra.mxu0 %v386
    %562 = vmatprep.subr.mxu0 0.0
    %563 = vmatpush1.msra.mxu0 %v385
    %564 = vmatprep.subr.mxu0 0.0
    %565 = vmatpush2.msra.mxu0 0.0
    %566 = vmatprep.subr.mxu0 0.0
    %567 = vmatpush2.msra.mxu0 0.0
    %568 = vmatprep.subr.mxu0 0.0
    %569 = vmatpush2.msra.mxu0 0.0
    %570 = vmatprep.subr.mxu0 0.0
    %571 = vmatpush2.msra.mxu0 0.0
    %572 = vmatprep.subr.mxu0 0.0
    %573 = vmatpush2.msra.mxu0 0.0
    %574 = vmatprep.subr.mxu0 0.0
    %575 = vmatpush2.msra.mxu0 0.0
    %576 = vmatprep.subr.mxu0 0.0
    %577 = vmatpush2.msra.mxu0 0.0
    %578 = vmatprep.subr.mxu0 0.0
    %579 = vmatpush2.msra.mxu0 0.0
    %580 = vmatprep.subr.mxu0 0.0
    %581 = vmatpush2.msra.mxu0 0.0
    %582 = vmatprep.subr.mxu0 0.0
    %583 = vmatpush2.msra.mxu0 0.0
    %584 = vmatprep.subr.mxu0 0.0
    %585 = vmatpush2.msra.mxu0 0.0
    %586 = vmatprep.subr.mxu0 0.0
    %587 = vmatpush2.msra.mxu0 0.0
    %588 = vmatprep.subr.mxu0 0.0
    %589 = vmatpush2.msra.mxu0 0.0
    %590 = vmatprep.subr.mxu0 0.0
    %591 = vmatpush2.msra.mxu0 0.0
    %592 = vmatprep.subr.mxu0 0.0
    %593 = vmatpush2.msra.mxu0 0.0
    %594 = vmatprep.subr.mxu0 0.0
    %595 = vmatpush2.msra.mxu0 0.0
    %596 = vmatprep.mubr.f32.mxu0 0.0
    %597 = vmatmul.mubr.f32.gmra.mxu0 %v530
    %v598 = vpop.f32.mrf.mxu0
    %v599 = vadd.f32 0.0, %v598
    %v600 = vpop.f32.mrf.mxu0
    %601 = vdwg.mxu0
    %v602 = vadd.f32 %v526, %v599
    %v603 = vld [vmem:[%s5] sm:$0x1]
    %v605 = vlaneseq
    %v606 = vshrl.u32 %v605, 7
    %v607 = vsub.s32 0, %v606
    %v608 = vrot.slane %v603, %v607
    %v610 = vadd.f32 %v602, %v608
    %611 = vst [vmem:[#allocation7] sm:$0xff] %v610
    // Predicated region
    $region34: #{tpu_custom_call.1} parent=1 // pred_check
      _
    $region35: #{tpu_custom_call.1} parent=1 // pred_check_branch
      %613 = sbr.rel (0) target = $region37
    $region36: #{tpu_custom_call.1} parent=1 // pred_region
      %s615 = ssub.s32 128, 128
      %616 = vsyncadd [#allocation4], %s615
      %s618 = sshll.u32 [#allocation7], 4
      %s619 = int_to_ptr.vmem [resolvable:$true] %s618
      %621 = dma.vmem_to_hbm [thread:$0]  %s619, 128, %s6, [#allocation4]
    $region37: #{tpu_custom_call.1} parent=1 // pred_fallthru
      _
    // Predicated region
    $region38: #{tpu_custom_call.1} parent=1 // pred_check
      _
    $region39: #{tpu_custom_call.1} parent=1 // pred_check_branch
      %623 = sbr.rel (0) target = $region41
    $region40: #{tpu_custom_call.1} parent=1 // pred_region
      %624 = dma.done [#allocation4], 128
    $region41: #{tpu_custom_call.1} parent=1 // pred_fallthru
      _
    %625 = vsyncpa [#allocation3], 1
    %626 = vsyncpa [#allocation6], 1
    %627 = vsyncpa [#allocation4], 1

</llo_original>
